<compile_context>
chip_gen: v7x
topology: tpu7x:2x2x1
jax: 0.10.0
libtpu: 0.0.40
codegen_flags: <defaults>
</compile_context>

<pallas_src>
import functools

import jax
import jax.numpy as jnp
from jax.experimental import pallas as pl
from jax.experimental.pallas import tpu as pltpu


def _spatial_attention_kernel(x_ref, g_ref, b_ref, o_ref, sum_sc, max_sc, *,
                              inv_c, c_total, c_tile):
    # x_ref : (1, Tc, HW)      one channel-tile of one batch element (lane-dense)
    # g_ref : (2*HW, HW)       folded conv operator (rows 0..HW-1: avg, HW..: max)
    # b_ref : (1, 1) SMEM      conv bias
    # o_ref : (1, 1, HW)       attention map (flattened) for this batch element
    # sum_sc, max_sc : (1, HW) f32 running channel-sum / channel-max
    c_step = pl.program_id(1)

    @pl.when(c_step == 0)
    def _():
        sum_sc[...] = jnp.zeros_like(sum_sc)
        max_sc[...] = jnp.full_like(max_sc, -jnp.inf)

    x = x_ref[0].astype(jnp.float32)                       # (Tc, HW)

    if c_total % c_tile != 0:
        # Ragged last tile: channels beyond C hold undefined padding -> mask.
        limit = jnp.minimum(c_total - c_step * c_tile, c_tile)
        ch = jax.lax.broadcasted_iota(jnp.int32, x.shape, 0)
        keep = ch < limit
        xs = jnp.where(keep, x, 0.0)
        xm = jnp.where(keep, x, -jnp.inf)
    else:
        xs = x
        xm = x

    sum_sc[...] += jnp.sum(xs, axis=0, keepdims=True)
    max_sc[...] = jnp.maximum(max_sc[...], jnp.max(xm, axis=0, keepdims=True))

    @pl.when(c_step == pl.num_programs(1) - 1)
    def _():
        avg = sum_sc[...] * inv_c                           # (1, HW)
        mx = max_sc[...]                                    # (1, HW)
        desc = jnp.concatenate([avg, mx], axis=-1)          # (1, 2*HW) lane-dense
        out = jnp.dot(desc, g_ref[...],
                      preferred_element_type=jnp.float32)   # (1, HW)
        out = jax.nn.sigmoid(out + b_ref[0, 0])
        o_ref[0] = out.astype(o_ref.dtype)


def _pick_channel_tile(C, hw, itemsize, target_bytes):
    """Channel tile sized for ~target_bytes per x block (multiple of 8 if tiling)."""
    tc = max(1, int(target_bytes) // max(1, hw * itemsize))
    if tc >= C:
        return C
    return max(8, (tc // 8) * 8)


def _build_conv_matrix(weight, H, W):
    """Fold the (1, 2, K, K) conv weight (zero padding) into a dense operator.

    Returns G of shape (2*H*W, H*W) such that for flattened descriptors
    desc = [avg_flat | max_flat] (1, 2*H*W):
        conv(desc_2d)[h, w] == (desc @ G)[0, h*W + w].
    """
    K = weight.shape[-1]
    P = (K - 1) // 2
    taps = jnp.asarray(weight, jnp.float32)[0]              # (2, K, K)

    hp = jnp.arange(H)[:, None, None, None]                 # source row h'
    wp = jnp.arange(W)[None, :, None, None]                 # source col w'
    ho = jnp.arange(H)[None, None, :, None]                 # output row h
    wo = jnp.arange(W)[None, None, None, :]                 # output col w
    dy = hp - ho + P
    dx = wp - wo + P
    valid = (dy >= 0) & (dy < K) & (dx >= 0) & (dx < K)
    dyc = jnp.clip(dy, 0, K - 1)
    dxc = jnp.clip(dx, 0, K - 1)
    g = jnp.where(valid[None], taps[:, dyc, dxc], 0.0)      # (2, H, W, H, W)
    return g.reshape(2 * H * W, H * W)


def spatial_attention(x, weight, bias, *, c_tile=None, target_block_bytes=4 << 20):
    """x: (B, C, H, W); weight: (1, 2, K, K); bias: (1,). Returns (B, 1, H, W)."""
    B, C, H, W = x.shape
    HW = H * W

    x_flat = x.reshape(B, C, HW)                            # lane-dense layout
    Tc = (_pick_channel_tile(C, HW, x.dtype.itemsize, target_block_bytes)
          if c_tile is None else c_tile)
    n_c = pl.cdiv(C, Tc)

    G = _build_conv_matrix(weight, H, W)                    # (2*HW, HW) f32
    b_smem = jnp.asarray(bias, jnp.float32).reshape(1, 1)

    kernel = functools.partial(_spatial_attention_kernel,
                               inv_c=1.0 / C, c_total=C, c_tile=Tc)

    cost = pl.CostEstimate(
        flops=2 * B * C * HW + 2 * B * (2 * HW) * HW,
        transcendentals=B * HW,
        bytes_accessed=(x.dtype.itemsize * B * C * HW
                        + 4 * (2 * HW * HW + B * HW + 1)),
    )

    # VMEM budget: double-buffered x block + (default double-buffered) operator
    # + accumulators; stays well under v7x's 64 MiB / v5e's 16 MiB-scoped budget
    # with the default 4 MiB block target.
    x_block_bytes = Tc * HW * x.dtype.itemsize
    vmem_need = 2 * x_block_bytes + 2 * int(G.size) * 4 + 2 * HW * 4 + (2 << 20)
    vmem_limit = int(min(max(vmem_need * 3 // 2, 16 << 20), 48 << 20))

    out = pl.pallas_call(
        kernel,
        out_shape=jax.ShapeDtypeStruct((B, 1, HW), x.dtype),
        grid_spec=pltpu.PrefetchScalarGridSpec(
            num_scalar_prefetch=0,
            grid=(B, n_c),
            in_specs=[
                pl.BlockSpec((1, Tc, HW), lambda b, c: (b, c, 0)),
                pl.BlockSpec((2 * HW, HW), lambda b, c: (0, 0)),
                pl.BlockSpec(memory_space=pltpu.MemorySpace.SMEM),
            ],
            out_specs=pl.BlockSpec((1, 1, HW), lambda b, c: (b, 0, 0)),
            scratch_shapes=[
                pltpu.VMEM((1, HW), jnp.float32),   # running channel sum
                pltpu.VMEM((1, HW), jnp.float32),   # running channel max
            ],
        ),
        compiler_params=pltpu.CompilerParams(
            dimension_semantics=("parallel", "arbitrary"),
            vmem_limit_bytes=vmem_limit),
        cost_estimate=cost,
    )(x_flat, G, b_smem)

    return out.reshape(B, 1, H, W)


def spatial_attention_ref(x, weight, bias):
    """Pure-JAX reference mirroring the PyTorch forward."""
    avg = jnp.mean(x, axis=1, keepdims=True)
    mx = jnp.max(x, axis=1, keepdims=True)
    desc = jnp.concatenate([avg, mx], axis=1)               # (B, 2, H, W)
    out = jax.lax.conv_general_dilated(
        desc, weight, window_strides=(1, 1), padding=((3, 3), (3, 3)),
        dimension_numbers=("NCHW", "OIHW", "NCHW"))
    return jax.nn.sigmoid(out + bias.reshape(1, 1, 1, 1))


if __name__ == "__main__":
    B, C, H, W = 2, 4, 16, 16
    K = 7

    key = jax.random.PRNGKey(0)
    kx, kw, kb = jax.random.split(key, 3)

    x = jax.random.normal(kx, (B, C, H, W), dtype=jnp.float32)
    weight = jax.random.normal(kw, (1, 2, K, K), dtype=jnp.float32) * (1.0 / (2 * K * K)) ** 0.5
    bias = jax.random.normal(kb, (1,), dtype=jnp.float32) * 0.1

    out = spatial_attention(x, weight, bias)
    out = jax.block_until_ready(out)

    ref = spatial_attention_ref(x, weight, bias)
    assert out.shape == (B, 1, H, W)
    assert jnp.allclose(out, ref, atol=5e-3, rtol=1e-3), (
        "mismatch vs reference, max abs err = "
        + str(float(jnp.max(jnp.abs(out - ref)))))

    print("KERNEL_OK")
</pallas_src>

<mosaic_0001>
module attributes {stable_mosaic.version = 11 : i64} {
  func.func @_spatial_attention_kernel(%arg0: i32, %arg1: i32, %arg2: memref<1x4x256xf32, #tpu.memory_space<vmem>>, %arg3: memref<512x256xf32, #tpu.memory_space<vmem>>, %arg4: memref<1x1xf32, #tpu.memory_space<smem>>, %arg5: memref<1x1x256xf32, #tpu.memory_space<vmem>>, %arg6: memref<1x256xf32, #tpu.memory_space<vmem>>, %arg7: memref<1x256xf32, #tpu.memory_space<vmem>>) attributes {dimension_semantics = [#tpu.dimension_semantics<parallel>, #tpu.dimension_semantics<arbitrary>], iteration_bounds = array<i64: 2, 1>, scalar_prefetch = 0 : i64, scratch_operands = 2 : i64, tpu.core_type = #tpu.core_type<tc>, window_params = [{transform_indices = @transform_0, window_bounds = array<i64: 1, 4, 256>}, {pipeline_mode = #tpu.pipeline_mode<synchronous>, transform_indices = @transform_1, window_bounds = array<i64: 512, 256>}, {transform_indices = @transform_2, window_bounds = array<i64: 1, 1>}, {transform_indices = @transform_3, window_bounds = array<i64: 1, 1, 256>}]} {
    %c0_i32 = arith.constant 0 : i32
    %0 = arith.cmpi eq, %arg1, %c0_i32 : i32
    %1 = arith.extui %0 : i1 to i32
    %c0_i32_0 = arith.constant 0 : i32
    %2 = arith.cmpi ne, %1, %c0_i32_0 : i32
    scf.if %2 {
      %cst_14 = arith.constant 0.000000e+00 : f32
      %18 = vector.broadcast %cst_14 : f32 to vector<1x256xf32>
      %c0_15 = arith.constant 0 : index
      %c0_16 = arith.constant 0 : index
      %19 = vector.load %arg6[%c0_15, %c0_16] : memref<1x256xf32, #tpu.memory_space<vmem>>, vector<1x256xf32>
      tpu.vector_store %arg6[%c0_15, %c0_16], %18 {strides = array<i32>} : memref<1x256xf32, #tpu.memory_space<vmem>>, vector<1x256xf32>,
      %cst_17 = arith.constant 0xFF800000 : f32
      %20 = vector.broadcast %cst_17 : f32 to vector<1x256xf32>
      %c0_18 = arith.constant 0 : index
      %c0_19 = arith.constant 0 : index
      %21 = vector.load %arg7[%c0_18, %c0_19] : memref<1x256xf32, #tpu.memory_space<vmem>>, vector<1x256xf32>
      tpu.vector_store %arg7[%c0_18, %c0_19], %20 {strides = array<i32>} : memref<1x256xf32, #tpu.memory_space<vmem>>, vector<1x256xf32>,
    } else {
    }
    %c0 = arith.constant 0 : index
    %c0_1 = arith.constant 0 : index
    %c0_2 = arith.constant 0 : index
    %3 = vector.load %arg2[%c0, %c0_1, %c0_2] : memref<1x4x256xf32, #tpu.memory_space<vmem>>, vector<1x4x256xf32>
    %4 = vector.shape_cast %3 : vector<1x4x256xf32> to vector<4x256xf32>
    %c0_3 = arith.constant 0 : index
    %c0_4 = arith.constant 0 : index
    %5 = vector.load %arg6[%c0_3, %c0_4] : memref<1x256xf32, #tpu.memory_space<vmem>>, vector<1x256xf32>
    %cst = arith.constant dense<0.000000e+00> : vector<256xf32>
    %6 = vector.multi_reduction <add>, %4, %cst [0] : vector<4x256xf32> to vector<256xf32>
    %7 = vector.shape_cast %6 : vector<256xf32> to vector<1x256xf32>
    %8 = arith.addf %5, %7 : vector<1x256xf32>
    %c0_5 = arith.constant 0 : index
    %c0_6 = arith.constant 0 : index
    %9 = vector.load %arg6[%c0_5, %c0_6] : memref<1x256xf32, #tpu.memory_space<vmem>>, vector<1x256xf32>
    tpu.vector_store %arg6[%c0_5, %c0_6], %8 {strides = array<i32>} : memref<1x256xf32, #tpu.memory_space<vmem>>, vector<1x256xf32>,
    %c0_7 = arith.constant 0 : index
    %c0_8 = arith.constant 0 : index
    %10 = vector.load %arg7[%c0_7, %c0_8] : memref<1x256xf32, #tpu.memory_space<vmem>>, vector<1x256xf32>
    %cst_9 = arith.constant dense<0xFF800000> : vector<256xf32>
    %11 = vector.multi_reduction <maximumf>, %4, %cst_9 [0] : vector<4x256xf32> to vector<256xf32>
    %12 = vector.shape_cast %11 : vector<256xf32> to vector<1x256xf32>
    %13 = arith.maximumf %10, %12 : vector<1x256xf32>
    %c0_10 = arith.constant 0 : index
    %c0_11 = arith.constant 0 : index
    %14 = vector.load %arg7[%c0_10, %c0_11] : memref<1x256xf32, #tpu.memory_space<vmem>>, vector<1x256xf32>
    tpu.vector_store %arg7[%c0_10, %c0_11], %13 {strides = array<i32>} : memref<1x256xf32, #tpu.memory_space<vmem>>, vector<1x256xf32>,
    %c0_i32_12 = arith.constant 0 : i32
    %15 = arith.cmpi eq, %arg1, %c0_i32_12 : i32
    %16 = arith.extui %15 : i1 to i32
    %c0_i32_13 = arith.constant 0 : i32
    %17 = arith.cmpi ne, %16, %c0_i32_13 : i32
    scf.if %17 {
      %c0_14 = arith.constant 0 : index
      %c0_15 = arith.constant 0 : index
      %18 = vector.load %arg6[%c0_14, %c0_15] : memref<1x256xf32, #tpu.memory_space<vmem>>, vector<1x256xf32>
      %cst_16 = arith.constant 2.500000e-01 : f32
      %19 = vector.broadcast %cst_16 : f32 to vector<1x256xf32>
      %20 = arith.mulf %18, %19 : vector<1x256xf32>
      %c0_17 = arith.constant 0 : index
      %c0_18 = arith.constant 0 : index
      %21 = vector.load %arg7[%c0_17, %c0_18] : memref<1x256xf32, #tpu.memory_space<vmem>>, vector<1x256xf32>
      %22 = tpu.concatenate %20, %21 in 1 : vector<1x256xf32>, vector<1x256xf32> -> vector<1x512xf32>
      %c0_19 = arith.constant 0 : index
      %c0_20 = arith.constant 0 : index
      %23 = vector.load %arg3[%c0_19, %c0_20] : memref<512x256xf32, #tpu.memory_space<vmem>>, vector<512x256xf32>
      %cst_21 = arith.constant dense<0.000000e+00> : vector<1x256xf32>
      %24 = tpu.matmul %22, %23, %cst_21 {dimension_numbers = #tpu.dot_dimension_numbers<[1], [0], [0], [1], [0, 0, 1, 1], [], []>} : vector<1x512xf32>, vector<512x256xf32>, vector<1x256xf32> -> vector<1x256xf32>
      %c0_22 = arith.constant 0 : index
      %c0_23 = arith.constant 0 : index
      %25 = memref.load %arg4[%c0_22, %c0_23] : memref<1x1xf32, #tpu.memory_space<smem>>
      %26 = vector.broadcast %25 : f32 to vector<1x256xf32>
      %27 = arith.addf %24, %26 : vector<1x256xf32>
      %28 = arith.negf %27 : vector<1x256xf32>
      %29 = math.exp %28 : vector<1x256xf32>
      %cst_24 = arith.constant 1.000000e+00 : f32
      %30 = vector.broadcast %cst_24 : f32 to vector<1x256xf32>
      %31 = arith.addf %30, %29 : vector<1x256xf32>
      %32 = arith.divf %30, %31 : vector<1x256xf32>
      %c0_25 = arith.constant 0 : index
      %c0_26 = arith.constant 0 : index
      %c0_27 = arith.constant 0 : index
      %33 = vector.load %arg5[%c0_25, %c0_26, %c0_27] : memref<1x1x256xf32, #tpu.memory_space<vmem>>, vector<1x1x256xf32>
      %34 = vector.shape_cast %33 : vector<1x1x256xf32> to vector<1x256xf32>
      %35 = vector.shape_cast %32 : vector<1x256xf32> to vector<1x1x256xf32>
      tpu.vector_store %arg5[%c0_25, %c0_26, %c0_27], %35 {strides = array<i32>} : memref<1x1x256xf32, #tpu.memory_space<vmem>>, vector<1x1x256xf32>,
    } else {
    }
    return
  }
  func.func @transform_0(%arg0: i32, %arg1: i32) -> (i32, i32, i32) {
    %c0_i32 = arith.constant 0 : i32
    %c0_i32_0 = arith.constant 0 : i32
    return %arg0, %arg1, %c0_i32 : i32, i32, i32
  }
  func.func @transform_1(%arg0: i32, %arg1: i32) -> (i32, i32) {
    %c0_i32 = arith.constant 0 : i32
    %c0_i32_0 = arith.constant 0 : i32
    %c0_i32_1 = arith.constant 0 : i32
    return %c0_i32, %c0_i32_0 : i32, i32
  }
  func.func @transform_2(%arg0: i32, %arg1: i32) -> (i32, i32) {
    %c0_i32 = arith.constant 0 : i32
    %c0_i32_0 = arith.constant 0 : i32
    %c0_i32_1 = arith.constant 0 : i32
    return %c0_i32, %c0_i32_0 : i32, i32
  }
  func.func @transform_3(%arg0: i32, %arg1: i32) -> (i32, i32, i32) {
    %c0_i32 = arith.constant 0 : i32
    %c0_i32_0 = arith.constant 0 : i32
    %c0_i32_1 = arith.constant 0 : i32
    return %arg0, %c0_i32, %c0_i32_0 : i32, i32, i32
  }
}

</mosaic_0001>

<llo_original>
// kernel: tpu_custom_call.1
$region0: #{tpu_custom_call.1}
  #allocation0 [shape = 'u32[]', space=smem, size = 0x4, offset = 0x4, fixed_abs, tag = 'smem constant byte address 0x4 - core index']
  #allocation1 [shape = 'u32[144,128]{1,0:T(1,128)}', space=vmem, size = 0x12000, scoped, tag = 'internal scratch']
  #allocation2 [shape = 'f32[1,256]{1,0:T(1,128)}', space=vmem, size = 0x400, scoped, tag = 'scratch operand']
  #allocation3 [shape = 'f32[1,256]{1,0:T(1,128)}', space=vmem, size = 0x400, scoped, tag = 'scratch operand']
  #allocation4 [shape = 'f32[1,1]{1,0:T(1,128)S(6)}', space=smem, size = 0x200, scoped, tag = 'scoped memory for tpu_custom_call.1']
  %s0 = inlined_call_operand.hbm [shape: f32[2,4,256], index: 0, kind: input, shape index: {}]
  %s1 = inlined_call_operand.hbm [shape: f32[512,256], index: 1, kind: input, shape index: {}]
  %s2 = inlined_call_operand.<no memory space> [shape: f32[1,1], index: 2, kind: input, shape index: {}]
  %s3 = inlined_call_operand.hbm [shape: f32[2,1,256], index: 3, kind: output, shape index: {}]
  %s4 = sld [smem:[#allocation0]]
  $region61: #{tpu_custom_call.1} parent=0
    _
  %s6 = ssub.s32 1, %s4
  %s7 = scalar_select 0, %s6, %s4
  %8 = sst [smem:[#allocation4]] %s2
  $region1: #{tpu_custom_call.1} parent=0
    #allocation5 [shape = 'u8[8192]{0}', space=vmem, size = 0x2000, scoped, tag = 'input window, operand 0']
    #allocation6 [shape = 's32[2]{0}', space=sflag, size = 0x8, scoped, tag = 'scoped memory for tpu_custom_call.1']
    #allocation7 [shape = 's32[2]{0}', space=sflag, size = 0x8, scoped, tag = 'scoped memory for tpu_custom_call.1']
    #allocation8 [shape = 'u8[524288]{0}', space=vmem, size = 0x80000, scoped, tag = 'input window, operand 1, single buffered']
    #allocation9 [shape = 's32[1]{0}', space=sflag, size = 0x4, scoped, tag = 'scoped memory for tpu_custom_call.1']
    #allocation10 [shape = 'u8[2048]{0}', space=vmem, size = 0x800, scoped, tag = 'output window, operand 0']
    %9 = vsyncpa [#allocation6], 0
    %s10 = scalar_lea.sflag [#allocation6], 1
    %11 = vsyncpa %s10, 0
    %12 = vsyncpa [#allocation9], 0
    %13 = vsyncpa [#allocation7], 0
    %s14 = scalar_lea.sflag [#allocation7], 1
    %15 = vsyncpa %s14, 0
    loop: start=0, step=1, limit=4
    $region2: #{tpu_custom_call.1} parent=1 // loop_pre_header
      _
    $region3: #{tpu_custom_call.1} parent=1 // loop_header
      %s17 = sphi 0, %s21
      %p18 = scmp.ge.s32.totalorder %s17, 4
      %s24 = sphi 0, %s36
      %s25 = sphi 0, %s32
      %s26 = sphi 0, %s24
      %s27 = sphi 0, %s25
      %s28 = sphi 0, %s26
      %s29 = sphi 0, %s27
      %s41 = sphi 0, %s43
      %s44 = sphi 0, %s41
      %s45 = sphi 0, %s44
      %s61 = sphi 0, %s45
      %s65 = sphi 0, %s65
      %s67 = sphi 0, %s65
      %s68 = sphi 0, %s67
      %s82 = sphi 0, %s68
      %s86 = sphi 0, %s86
      %s88 = sphi 0, %s86
      %s89 = sphi 0, %s88
      %s103 = sphi 0, %s89
      %s109 = sphi 0, %s111
      %s112 = sphi 0, %s109
      %s113 = sphi 0, %s112
      %s129 = sphi 0, %s113
    $region4: #{tpu_custom_call.1} parent=1 // loop_header_branch
      %20 = sbr.rel (%p18) target = $region8
    $region5: #{tpu_custom_call.1} parent=1 // loop_body
      %s22 = ssub.s32 %s17, 1
      %s23 = ssub.s32 %s17, 2
      %s30 = sadd.s32 1, %s25
      %p31 = scmp.ge.s32.totalorder %s30, 1
      %s32 = scalar_select %p31, 0, %s30
      %s33 = sadd.s32 1, %s24
      %s34 = scalar_select %p31, %s33, %s24
      %p35 = scmp.ge.s32.totalorder %s34, 2
      %s36 = scalar_select %p35, 0, %s34
      %s37 = ssub.s32 %s24, %s36
      %s38 = ssub.s32 %s25, %s32
      %s39 = sor.u32 %s37, %s38
      %p40 = scmp.eq.s32.totalorder %s39, 0
      %s42 = sadd.s32 %s41, 1
      %s43 = scalar_select %p40, %s41, %s42
      %p46 = pneg %p40
      %p47 = scmp.eq.s32.totalorder %s17, 1
      %p48 = por %p46, %p47
      %p49 = scmp.ne.s32.totalorder %s41, %s44
      %p50 = scmp.eq.s32.totalorder %s17, 0
      %p51 = por %p49, %p50
      %p52 = scmp.ne.s32.totalorder %s41, %s44
      %p53 = scmp.eq.s32.totalorder %s22, 1
      %p54 = por %p52, %p53
      %p55 = scmp.ne.s32.totalorder %s44, %s45
      %p56 = scmp.eq.s32.totalorder %s22, 0
      %p57 = por %p55, %p56
      %p58 = scmp.ne.s32.totalorder %s44, %s45
      %p59 = scmp.eq.s32.totalorder %s23, 1
      %p60 = por %p58, %p59
      %p62 = scmp.ne.s32.totalorder %s45, %s61
      %p63 = scmp.eq.s32.totalorder %s23, 0
      %p64 = por %p62, %p63
      %s66 = sadd.s32 %s65, 1
      %p69 = scmp.eq.s32.totalorder %s17, 1
      %p70 = scmp.ne.s32.totalorder %s65, %s67
      %p71 = scmp.eq.s32.totalorder %s17, 0
      %p72 = por %p70, %p71
      %p73 = scmp.ne.s32.totalorder %s65, %s67
      %p74 = scmp.eq.s32.totalorder %s22, 1
      %p75 = por %p73, %p74
      %p76 = scmp.ne.s32.totalorder %s67, %s68
      %p77 = scmp.eq.s32.totalorder %s22, 0
      %p78 = por %p76, %p77
      %p79 = scmp.ne.s32.totalorder %s67, %s68
      %p80 = scmp.eq.s32.totalorder %s23, 1
      %p81 = por %p79, %p80
      %p83 = scmp.ne.s32.totalorder %s68, %s82
      %p84 = scmp.eq.s32.totalorder %s23, 0
      %p85 = por %p83, %p84
      %s87 = sadd.s32 %s86, 1
      %p90 = scmp.eq.s32.totalorder %s17, 1
      %p91 = scmp.ne.s32.totalorder %s86, %s88
      %p92 = scmp.eq.s32.totalorder %s17, 0
      %p93 = por %p91, %p92
      %p94 = scmp.ne.s32.totalorder %s86, %s88
      %p95 = scmp.eq.s32.totalorder %s22, 1
      %p96 = por %p94, %p95
      %p97 = scmp.ne.s32.totalorder %s88, %s89
      %p98 = scmp.eq.s32.totalorder %s22, 0
      %p99 = por %p97, %p98
      %p100 = scmp.ne.s32.totalorder %s88, %s89
      %p101 = scmp.eq.s32.totalorder %s23, 1
      %p102 = por %p100, %p101
      %p104 = scmp.ne.s32.totalorder %s89, %s103
      %p105 = scmp.eq.s32.totalorder %s23, 0
      %p106 = por %p104, %p105
      %s107 = ssub.s32 %s24, %s36
      %p108 = scmp.eq.s32.totalorder %s107, 0
      %s110 = sadd.s32 %s109, 1
      %s111 = scalar_select %p108, %s109, %s110
      %p114 = pneg %p108
      %p115 = scmp.eq.s32.totalorder %s17, 1
      %p116 = por %p114, %p115
      %p117 = scmp.ne.s32.totalorder %s109, %s112
      %p118 = scmp.eq.s32.totalorder %s17, 0
      %p119 = por %p117, %p118
      %p120 = scmp.ne.s32.totalorder %s109, %s112
      %p121 = scmp.eq.s32.totalorder %s22, 1
      %p122 = por %p120, %p121
      %p123 = scmp.ne.s32.totalorder %s112, %s113
      %p124 = scmp.eq.s32.totalorder %s22, 0
      %p125 = por %p123, %p124
      %p126 = scmp.ne.s32.totalorder %s112, %s113
      %p127 = scmp.eq.s32.totalorder %s23, 1
      %p128 = por %p126, %p127
      %p130 = scmp.ne.s32.totalorder %s113, %s129
      %p131 = scmp.eq.s32.totalorder %s23, 0
      %p132 = por %p130, %p131
      %p133 = scmp.le.s32.totalorder 1, %s17
      %p134 = scmp.lt.s32.totalorder %s17, 3
      %p135 = pnand %p133, %p134
      %p136 = pneg %p135
      // Predicated region
      $region9: #{tpu_custom_call.1} parent=5 // pred_check
        _
      $region10: #{tpu_custom_call.1} parent=5 // pred_check_branch
        %138 = sbr.rel (%p135) target = $region12
      $region11: #{tpu_custom_call.1} parent=5 // pred_region
        %s139 = ssub.s32 %s17, 1
        // Predicated region
        $region13: #{tpu_custom_call.1} parent=11 // pred_check
          %p140 = pneg %p78
        $region14: #{tpu_custom_call.1} parent=11 // pred_check_branch
          %142 = sbr.rel (%p140) target = $region16
        $region15: #{tpu_custom_call.1} parent=11 // pred_region
          %s144 = ssub.s32 16384, 16384
          %145 = vsyncadd [#allocation9], %s144
          %s146 = sshll.u32 [#allocation8], 4
          %s147 = int_to_ptr.vmem [resolvable:$true] %s146
          %152 = dma.hbm_to_vmem [thread:$0]  %s1, 16384, %s147, [#allocation9], 256, 256, 16
        $region16: #{tpu_custom_call.1} parent=11 // pred_fallthru
          _
        // Predicated region
        $region17: #{tpu_custom_call.1} parent=11 // pred_check
          %p153 = pneg %p99
        $region18: #{tpu_custom_call.1} parent=11 // pred_check_branch
          %155 = sbr.rel (%p153) target = $region20
        $region19: #{tpu_custom_call.1} parent=11 // pred_region
          _
        $region20: #{tpu_custom_call.1} parent=11 // pred_fallthru
          _
      $region12: #{tpu_custom_call.1} parent=5 // pred_fallthru
        _
      %p156 = scmp.lt.s32.totalorder %s17, 2
      // Predicated region
      $region21: #{tpu_custom_call.1} parent=5 // pred_check
        %p157 = pneg %p156
      $region22: #{tpu_custom_call.1} parent=5 // pred_check_branch
        %159 = sbr.rel (%p157) target = $region24
      $region23: #{tpu_custom_call.1} parent=5 // pred_region
        // Predicated region
        $region25: #{tpu_custom_call.1} parent=23 // pred_check
          %p160 = pneg %p51
        $region26: #{tpu_custom_call.1} parent=23 // pred_check_branch
          %162 = sbr.rel (%p160) target = $region28
        $region27: #{tpu_custom_call.1} parent=23 // pred_region
          %s163 = sand.u32 %s41, 1
          %s164 = scalar_lea.sflag [#allocation6], %s163
          %s165 = sand.u32 %s41, 1
          %s166 = smul.addr %s165, 8
          %s167 = scalar_lea.vmem [#allocation5], %s166
          %s169 = ssub.s32 128, 128
          %170 = vsyncadd %s164, %s169
          %s171 = smul.addr %s25, 2
          %s172 = smul.addr %s24, 2
          %s173 = sadd.s32 %s171, %s172
          %s174 = smul.addr %s173, 64
          %s175 = scalar_lea.hbm %s0, %s174
          %s177 = sshll.u32 %s167, 4
          %s178 = int_to_ptr.vmem [resolvable:$true] %s177
          %180 = dma.hbm_to_vmem [thread:$0]  %s175, 128, %s178, %s164
        $region28: #{tpu_custom_call.1} parent=23 // pred_fallthru
          _
      $region24: #{tpu_custom_call.1} parent=5 // pred_fallthru
        _
      %p181 = scmp.le.s32.totalorder 1, %s17
      %p182 = scmp.lt.s32.totalorder %s17, 3
      %p183 = pnand %p181, %p182
      %p184 = pneg %p183
      // Predicated region
      $region29: #{tpu_custom_call.1} parent=5 // pred_check
        _
      $region30: #{tpu_custom_call.1} parent=5 // pred_check_branch
        %186 = sbr.rel (%p183) target = $region32
      $region31: #{tpu_custom_call.1} parent=5 // pred_region
        %s187 = ssub.s32 %s17, 1
        %s188 = sand.u32 %s44, 1
        %s189 = scalar_lea.sflag [#allocation6], %s188
        %s190 = sand.u32 %s44, 1
        %s191 = smul.addr %s190, 8
        %s192 = scalar_lea.vmem [#allocation5], %s191
        // Predicated region
        $region33: #{tpu_custom_call.1} parent=31 // pred_check
          %p193 = pneg %p57
        $region34: #{tpu_custom_call.1} parent=31 // pred_check_branch
          %195 = sbr.rel (%p193) target = $region36
        $region35: #{tpu_custom_call.1} parent=31 // pred_region
          %196 = dma.done %s189, 128
        $region36: #{tpu_custom_call.1} parent=31 // pred_fallthru
          _
        // Predicated region
        $region37: #{tpu_custom_call.1} parent=31 // pred_check
          %p197 = pneg %p78
        $region38: #{tpu_custom_call.1} parent=31 // pred_check_branch
          %199 = sbr.rel (%p197) target = $region40
        $region39: #{tpu_custom_call.1} parent=31 // pred_region
          %200 = dma.done [#allocation9], 16384
        $region40: #{tpu_custom_call.1} parent=31 // pred_fallthru
          _
        %s201 = sand.u32 %s44, 1
        %s202 = scalar_lea.sflag [#allocation6], %s201
        %s203 = sand.u32 %s44, 1
        %s204 = smul.addr %s203, 8
        %s205 = scalar_lea.vmem [#allocation5], %s204
        %p206 = pneg %p57
        %p207 = pneg %p54
        %p208 = pneg %p78
        %p209 = pneg %p75
        %p210 = pneg %p99
        %p211 = pneg %p96
        %p212 = pneg %p125
        %p213 = pneg %p122
        %s214 = sand.u32 %s112, 1
        %s215 = scalar_lea.sflag [#allocation7], %s214
        %s216 = sand.u32 %s112, 1
        %s217 = smul.addr %s216, 2
        %s218 = scalar_lea.vmem [#allocation10], %s217
        %p219 = scmp.eq.s32.totalorder %s27, 0
        // Predicated region
        $region41: #{tpu_custom_call.1} parent=31 // pred_check
          %p220 = pneg %p219
        $region42: #{tpu_custom_call.1} parent=31 // pred_check_branch
          %222 = sbr.rel (%p220) target = $region44
        $region43: #{tpu_custom_call.1} parent=31 // pred_region
          %v223 = vlaneseq
          %vm224 = vcmp.ge.s32.totalorder %v223, 0
          %vm225 = vcmp.lt.s32.totalorder %v223, 256
          %vm226 = vmand %vm224, %vm225
          %227 = vst.msk [vmem:[#allocation2] sm:$0x3] %vm226, 0.0
          %228 = vst.msk [vmem:[#allocation3] sm:$0x3] %vm226, -inf
        $region44: #{tpu_custom_call.1} parent=31 // pred_fallthru
          _
        %v229 = vld [vmem:[%s192] sm:$0xff]
        %v230 = vld [vmem:[#allocation2] sm:$0x3]
        %v232 = vcombine.high %v229, %v229
        %vm234 = vcmask 1043456
        %v235 = vsel %vm234, %v229, 0.0
        %v236 = vrot.slane %v235, 4
        %v237 = vadd.f32 %v235, %v236
        %v238 = vrot.slane %v237, 2
        %v239 = vadd.f32 %v237, %v238
        %v240 = vrot.slane %v239, 1
        %v241 = vadd.f32 %v239, %v240
        %v242 = vsel %vm234, %v232, 0.0
        %v243 = vrot.slane %v242, 4
        %v244 = vadd.f32 %v242, %v243
        %v245 = vrot.slane %v244, 2
        %v246 = vadd.f32 %v244, %v245
        %v247 = vrot.slane %v246, 1
        %v248 = vadd.f32 %v246, %v247
        %v251 = vcombine.low %v241, %v248
        %v253 = vunpack.c.l.s4 1966171168
        %v254 = vunpack.c.0.s8 %v253
        %v255 = vlaneseq
        %v256 = vshrl.u32 %v255, 7
        %v257 = vsub.s32 %v254, %v256
        %v258 = vrot.slane %v251, %v257
        %v260 = vunpack.c.l.s4 1966171168
        %v261 = vunpack.c.0.s8 %v260
        %v262 = vlaneseq
        %v263 = vshrl.u32 %v262, 7
        %v264 = vsub.s32 %v261, %v263
        %v265 = vrot.slane %v258, %v264
        %v267 = vadd.f32 %v230, %v265
        %v268 = vlaneseq
        %vm269 = vcmp.ge.s32.totalorder %v268, 0
        %vm270 = vcmp.lt.s32.totalorder %v268, 256
        %vm271 = vmand %vm269, %vm270
        %272 = vst.msk [vmem:[#allocation2] sm:$0x3] %vm271, %v267
        %v273 = vld [vmem:[#allocation3] sm:$0x3]
        %v274 = vsel %vm234, %v229, -inf
        %v275 = vrot.slane %v274, 4
        %v276 = vmax.f32 %v274, %v275
        %v277 = vrot.slane %v276, 2
        %v278 = vmax.f32 %v276, %v277
        %v279 = vrot.slane %v278, 1
        %v280 = vmax.f32 %v278, %v279
        %v281 = vsel %vm234, %v232, -inf
        %v282 = vrot.slane %v281, 4
        %v283 = vmax.f32 %v281, %v282
        %v284 = vrot.slane %v283, 2
        %v285 = vmax.f32 %v283, %v284
        %v286 = vrot.slane %v285, 1
        %v287 = vmax.f32 %v285, %v286
        %v290 = vcombine.low %v280, %v287
        %v292 = vunpack.c.l.s4 1966171168
        %v293 = vunpack.c.0.s8 %v292
        %v294 = vlaneseq
        %v295 = vshrl.u32 %v294, 7
        %v296 = vsub.s32 %v293, %v295
        %v297 = vrot.slane %v290, %v296
        %v299 = vunpack.c.l.s4 1966171168
        %v300 = vunpack.c.0.s8 %v299
        %v301 = vlaneseq
        %v302 = vshrl.u32 %v301, 7
        %v303 = vsub.s32 %v300, %v302
        %v304 = vrot.slane %v297, %v303
        %v306 = vmax.f32 %v273, %v304
        %307 = vst.msk [vmem:[#allocation3] sm:$0x3] %vm271, %v306
        // Predicated region
        $region45: #{tpu_custom_call.1} parent=31 // pred_check
          %p308 = pneg %p219
        $region46: #{tpu_custom_call.1} parent=31 // pred_check_branch
          %310 = sbr.rel (%p308) target = $region48
        $region47: #{tpu_custom_call.1} parent=31 // pred_region
          %v311 = vld [vmem:[#allocation2] sm:$0x3]
          %v312 = vmul.f32 %v311, 0.25
          %v313 = vld [vmem:[#allocation3] sm:$0x3]
          %v315 = vlaneseq
          %v316 = vshrl.u32 %v315, 7
          %v317 = vsub.s32 0, %v316
          %v318 = vrot.slane %v312, %v317
          %v319 = vlaneseq
          %v320 = vshrl.u32 %v319, 7
          %v321 = vsub.s32 1, %v320
          %v322 = vrot.slane %v312, %v321
          %v326 = vlaneseq
          %v327 = vshrl.u32 %v326, 7
          %v328 = vsub.s32 0, %v327
          %v329 = vrot.slane %v313, %v328
          %v330 = vlaneseq
          %v331 = vshrl.u32 %v330, 7
          %v332 = vsub.s32 1, %v331
          %v333 = vrot.slane %v313, %v332
          %v336 = vld [vmem:[#allocation8] sm:$0xff]
          %v337 = vld [vmem:[#allocation8 + $0x8] sm:$0xff]
          %v338 = vld [vmem:[#allocation8 + $0x10] sm:$0xff]
          %v339 = vld [vmem:[#allocation8 + $0x18] sm:$0xff]
          %v340 = vld [vmem:[#allocation8 + $0x20] sm:$0xff]
          %v341 = vld [vmem:[#allocation8 + $0x28] sm:$0xff]
          %v342 = vld [vmem:[#allocation8 + $0x30] sm:$0xff]
          %v343 = vld [vmem:[#allocation8 + $0x38] sm:$0xff]
          %v344 = vld [vmem:[#allocation8 + $0x40] sm:$0xff]
          %v345 = vld [vmem:[#allocation8 + $0x48] sm:$0xff]
          %v346 = vld [vmem:[#allocation8 + $0x50] sm:$0xff]
          %v347 = vld [vmem:[#allocation8 + $0x58] sm:$0xff]
          %v348 = vld [vmem:[#allocation8 + $0x60] sm:$0xff]
          %v349 = vld [vmem:[#allocation8 + $0x68] sm:$0xff]
          %v350 = vld [vmem:[#allocation8 + $0x70] sm:$0xff]
          %v351 = vld [vmem:[#allocation8 + $0x78] sm:$0xff]
          %v352 = vld [vmem:[#allocation8 + $0x80] sm:$0xff]
          %v353 = vld [vmem:[#allocation8 + $0x88] sm:$0xff]
          %v354 = vld [vmem:[#allocation8 + $0x90] sm:$0xff]
          %v355 = vld [vmem:[#allocation8 + $0x98] sm:$0xff]
          %v356 = vld [vmem:[#allocation8 + $0xa0] sm:$0xff]
          %v357 = vld [vmem:[#allocation8 + $0xa8] sm:$0xff]
          %v358 = vld [vmem:[#allocation8 + $0xb0] sm:$0xff]
          %v359 = vld [vmem:[#allocation8 + $0xb8] sm:$0xff]
          %v360 = vld [vmem:[#allocation8 + $0xc0] sm:$0xff]
          %v361 = vld [vmem:[#allocation8 + $0xc8] sm:$0xff]
          %v362 = vld [vmem:[#allocation8 + $0xd0] sm:$0xff]
          %v363 = vld [vmem:[#allocation8 + $0xd8] sm:$0xff]
          %v364 = vld [vmem:[#allocation8 + $0xe0] sm:$0xff]
          %v365 = vld [vmem:[#allocation8 + $0xe8] sm:$0xff]
          %v366 = vld [vmem:[#allocation8 + $0xf0] sm:$0xff]
          %v367 = vld [vmem:[#allocation8 + $0xf8] sm:$0xff]
          %v368 = vld [vmem:[#allocation8 + $0x100] sm:$0xff]
          %v369 = vld [vmem:[#allocation8 + $0x108] sm:$0xff]
          %v370 = vld [vmem:[#allocation8 + $0x110] sm:$0xff]
          %v371 = vld [vmem:[#allocation8 + $0x118] sm:$0xff]
          %v372 = vld [vmem:[#allocation8 + $0x120] sm:$0xff]
          %v373 = vld [vmem:[#allocation8 + $0x128] sm:$0xff]
          %v374 = vld [vmem:[#allocation8 + $0x130] sm:$0xff]
          %v375 = vld [vmem:[#allocation8 + $0x138] sm:$0xff]
          %v376 = vld [vmem:[#allocation8 + $0x140] sm:$0xff]
          %v377 = vld [vmem:[#allocation8 + $0x148] sm:$0xff]
          %v378 = vld [vmem:[#allocation8 + $0x150] sm:$0xff]
          %v379 = vld [vmem:[#allocation8 + $0x158] sm:$0xff]
          %v380 = vld [vmem:[#allocation8 + $0x160] sm:$0xff]
          %v381 = vld [vmem:[#allocation8 + $0x168] sm:$0xff]
          %v382 = vld [vmem:[#allocation8 + $0x170] sm:$0xff]
          %v383 = vld [vmem:[#allocation8 + $0x178] sm:$0xff]
          %v384 = vld [vmem:[#allocation8 + $0x180] sm:$0xff]
          %v385 = vld [vmem:[#allocation8 + $0x188] sm:$0xff]
          %v386 = vld [vmem:[#allocation8 + $0x190] sm:$0xff]
          %v387 = vld [vmem:[#allocation8 + $0x198] sm:$0xff]
          %v388 = vld [vmem:[#allocation8 + $0x1a0] sm:$0xff]
          %v389 = vld [vmem:[#allocation8 + $0x1a8] sm:$0xff]
          %v390 = vld [vmem:[#allocation8 + $0x1b0] sm:$0xff]
          %v391 = vld [vmem:[#allocation8 + $0x1b8] sm:$0xff]
          %v392 = vld [vmem:[#allocation8 + $0x1c0] sm:$0xff]
          %v393 = vld [vmem:[#allocation8 + $0x1c8] sm:$0xff]
          %v394 = vld [vmem:[#allocation8 + $0x1d0] sm:$0xff]
          %v395 = vld [vmem:[#allocation8 + $0x1d8] sm:$0xff]
          %v396 = vld [vmem:[#allocation8 + $0x1e0] sm:$0xff]
          %v397 = vld [vmem:[#allocation8 + $0x1e8] sm:$0xff]
          %v398 = vld [vmem:[#allocation8 + $0x1f0] sm:$0xff]
          %v399 = vld [vmem:[#allocation8 + $0x1f8] sm:$0xff]
          %v400 = vld [vmem:[#allocation8 + $0x200] sm:$0xff]
          %v401 = vld [vmem:[#allocation8 + $0x208] sm:$0xff]
          %v402 = vld [vmem:[#allocation8 + $0x210] sm:$0xff]
          %v403 = vld [vmem:[#allocation8 + $0x218] sm:$0xff]
          %v404 = vld [vmem:[#allocation8 + $0x220] sm:$0xff]
          %v405 = vld [vmem:[#allocation8 + $0x228] sm:$0xff]
          %v406 = vld [vmem:[#allocation8 + $0x230] sm:$0xff]
          %v407 = vld [vmem:[#allocation8 + $0x238] sm:$0xff]
          %v408 = vld [vmem:[#allocation8 + $0x240] sm:$0xff]
          %v409 = vld [vmem:[#allocation8 + $0x248] sm:$0xff]
          %v410 = vld [vmem:[#allocation8 + $0x250] sm:$0xff]
          %v411 = vld [vmem:[#allocation8 + $0x258] sm:$0xff]
          %v412 = vld [vmem:[#allocation8 + $0x260] sm:$0xff]
          %v413 = vld [vmem:[#allocation8 + $0x268] sm:$0xff]
          %v414 = vld [vmem:[#allocation8 + $0x270] sm:$0xff]
          %v415 = vld [vmem:[#allocation8 + $0x278] sm:$0xff]
          %v416 = vld [vmem:[#allocation8 + $0x280] sm:$0xff]
          %v417 = vld [vmem:[#allocation8 + $0x288] sm:$0xff]
          %v418 = vld [vmem:[#allocation8 + $0x290] sm:$0xff]
          %v419 = vld [vmem:[#allocation8 + $0x298] sm:$0xff]
          %v420 = vld [vmem:[#allocation8 + $0x2a0] sm:$0xff]
          %v421 = vld [vmem:[#allocation8 + $0x2a8] sm:$0xff]
          %v422 = vld [vmem:[#allocation8 + $0x2b0] sm:$0xff]
          %v423 = vld [vmem:[#allocation8 + $0x2b8] sm:$0xff]
          %v424 = vld [vmem:[#allocation8 + $0x2c0] sm:$0xff]
          %v425 = vld [vmem:[#allocation8 + $0x2c8] sm:$0xff]
          %v426 = vld [vmem:[#allocation8 + $0x2d0] sm:$0xff]
          %v427 = vld [vmem:[#allocation8 + $0x2d8] sm:$0xff]
          %v428 = vld [vmem:[#allocation8 + $0x2e0] sm:$0xff]
          %v429 = vld [vmem:[#allocation8 + $0x2e8] sm:$0xff]
          %v430 = vld [vmem:[#allocation8 + $0x2f0] sm:$0xff]
          %v431 = vld [vmem:[#allocation8 + $0x2f8] sm:$0xff]
          %v432 = vld [vmem:[#allocation8 + $0x300] sm:$0xff]
          %v433 = vld [vmem:[#allocation8 + $0x308] sm:$0xff]
          %v434 = vld [vmem:[#allocation8 + $0x310] sm:$0xff]
          %v435 = vld [vmem:[#allocation8 + $0x318] sm:$0xff]
          %v436 = vld [vmem:[#allocation8 + $0x320] sm:$0xff]
          %v437 = vld [vmem:[#allocation8 + $0x328] sm:$0xff]
          %v438 = vld [vmem:[#allocation8 + $0x330] sm:$0xff]
          %v439 = vld [vmem:[#allocation8 + $0x338] sm:$0xff]
          %v440 = vld [vmem:[#allocation8 + $0x340] sm:$0xff]
          %v441 = vld [vmem:[#allocation8 + $0x348] sm:$0xff]
          %v442 = vld [vmem:[#allocation8 + $0x350] sm:$0xff]
          %v443 = vld [vmem:[#allocation8 + $0x358] sm:$0xff]
          %v444 = vld [vmem:[#allocation8 + $0x360] sm:$0xff]
          %v445 = vld [vmem:[#allocation8 + $0x368] sm:$0xff]
          %v446 = vld [vmem:[#allocation8 + $0x370] sm:$0xff]
          %v447 = vld [vmem:[#allocation8 + $0x378] sm:$0xff]
          %v448 = vld [vmem:[#allocation8 + $0x380] sm:$0xff]
          %v449 = vld [vmem:[#allocation8 + $0x388] sm:$0xff]
          %v450 = vld [vmem:[#allocation8 + $0x390] sm:$0xff]
          %v451 = vld [vmem:[#allocation8 + $0x398] sm:$0xff]
          %v452 = vld [vmem:[#allocation8 + $0x3a0] sm:$0xff]
          %v453 = vld [vmem:[#allocation8 + $0x3a8] sm:$0xff]
          %v454 = vld [vmem:[#allocation8 + $0x3b0] sm:$0xff]
          %v455 = vld [vmem:[#allocation8 + $0x3b8] sm:$0xff]
          %v456 = vld [vmem:[#allocation8 + $0x3c0] sm:$0xff]
          %v457 = vld [vmem:[#allocation8 + $0x3c8] sm:$0xff]
          %v458 = vld [vmem:[#allocation8 + $0x3d0] sm:$0xff]
          %v459 = vld [vmem:[#allocation8 + $0x3d8] sm:$0xff]
          %v460 = vld [vmem:[#allocation8 + $0x3e0] sm:$0xff]
          %v461 = vld [vmem:[#allocation8 + $0x3e8] sm:$0xff]
          %v462 = vld [vmem:[#allocation8 + $0x3f0] sm:$0xff]
          %v463 = vld [vmem:[#allocation8 + $0x3f8] sm:$0xff]
          %s464 = sld [smem:[#allocation4]]
          %v465 = vstv %s464
          %466 = vmatprep.subr.mxu0 %v337
          %467 = vmatpush1.msra.mxu0 %v336
          %468 = vmatprep.subr.mxu0 %v339
          %469 = vmatpush1.msra.mxu0 %v338
          %470 = vmatprep.subr.mxu0 %v341
          %471 = vmatpush1.msra.mxu0 %v340
          %472 = vmatprep.subr.mxu0 %v343
          %473 = vmatpush1.msra.mxu0 %v342
          %474 = vmatprep.subr.mxu0 %v345
          %475 = vmatpush1.msra.mxu0 %v344
          %476 = vmatprep.subr.mxu0 %v347
          %477 = vmatpush1.msra.mxu0 %v346
          %478 = vmatprep.subr.mxu0 %v349
          %479 = vmatpush1.msra.mxu0 %v348
          %480 = vmatprep.subr.mxu0 %v351
          %481 = vmatpush1.msra.mxu0 %v350
          %482 = vmatprep.subr.mxu0 %v353
          %483 = vmatpush1.msra.mxu0 %v352
          %484 = vmatprep.subr.mxu0 %v355
          %485 = vmatpush1.msra.mxu0 %v354
          %486 = vmatprep.subr.mxu0 %v357
          %487 = vmatpush1.msra.mxu0 %v356
          %488 = vmatprep.subr.mxu0 %v359
          %489 = vmatpush1.msra.mxu0 %v358
          %490 = vmatprep.subr.mxu0 %v361
          %491 = vmatpush1.msra.mxu0 %v360
          %492 = vmatprep.subr.mxu0 %v363
          %493 = vmatpush1.msra.mxu0 %v362
          %494 = vmatprep.subr.mxu0 %v365
          %495 = vmatpush1.msra.mxu0 %v364
          %496 = vmatprep.subr.mxu0 %v367
          %497 = vmatpush1.msra.mxu0 %v366
          %498 = vmatprep.subr.mxu0 %v369
          %499 = vmatpush1.msra.mxu0 %v368
          %500 = vmatprep.subr.mxu0 %v371
          %501 = vmatpush1.msra.mxu0 %v370
          %502 = vmatprep.subr.mxu0 %v373
          %503 = vmatpush1.msra.mxu0 %v372
          %504 = vmatprep.subr.mxu0 %v375
          %505 = vmatpush1.msra.mxu0 %v374
          %506 = vmatprep.subr.mxu0 %v377
          %507 = vmatpush1.msra.mxu0 %v376
          %508 = vmatprep.subr.mxu0 %v379
          %509 = vmatpush1.msra.mxu0 %v378
          %510 = vmatprep.subr.mxu0 %v381
          %511 = vmatpush1.msra.mxu0 %v380
          %512 = vmatprep.subr.mxu0 %v383
          %513 = vmatpush1.msra.mxu0 %v382
          %514 = vmatprep.subr.mxu0 %v385
          %515 = vmatpush1.msra.mxu0 %v384
          %516 = vmatprep.subr.mxu0 %v387
          %517 = vmatpush1.msra.mxu0 %v386
          %518 = vmatprep.subr.mxu0 %v389
          %519 = vmatpush1.msra.mxu0 %v388
          %520 = vmatprep.subr.mxu0 %v391
          %521 = vmatpush1.msra.mxu0 %v390
          %522 = vmatprep.subr.mxu0 %v393
          %523 = vmatpush1.msra.mxu0 %v392
          %524 = vmatprep.subr.mxu0 %v395
          %525 = vmatpush1.msra.mxu0 %v394
          %526 = vmatprep.subr.mxu0 %v397
          %527 = vmatpush1.msra.mxu0 %v396
          %528 = vmatprep.subr.mxu0 %v399
          %529 = vmatpush1.msra.mxu0 %v398
          %530 = vmatprep.mubr.f32.mxu0 %v322
          %531 = vmatmul.mubr.f32.gmra.mrb[0].mxu0 %v318
          %v532 = vpop.f32.mrb[0].mxu0
          %v533 = vadd.f32 %v465, %v532
          %v534 = vpop.f32.mrb[0].mxu0
          %v535 = vadd.f32 %v465, %v534
          %536 = vdwg.mxu0
          %537 = vmatprep.subr.mxu0 %v401
          %538 = vmatpush1.msra.mxu0 %v400
          %539 = vmatprep.subr.mxu0 %v403
          %540 = vmatpush1.msra.mxu0 %v402
          %541 = vmatprep.subr.mxu0 %v405
          %542 = vmatpush1.msra.mxu0 %v404
          %543 = vmatprep.subr.mxu0 %v407
          %544 = vmatpush1.msra.mxu0 %v406
          %545 = vmatprep.subr.mxu0 %v409
          %546 = vmatpush1.msra.mxu0 %v408
          %547 = vmatprep.subr.mxu0 %v411
          %548 = vmatpush1.msra.mxu0 %v410
          %549 = vmatprep.subr.mxu0 %v413
          %550 = vmatpush1.msra.mxu0 %v412
          %551 = vmatprep.subr.mxu0 %v415
          %552 = vmatpush1.msra.mxu0 %v414
          %553 = vmatprep.subr.mxu0 %v417
          %554 = vmatpush1.msra.mxu0 %v416
          %555 = vmatprep.subr.mxu0 %v419
          %556 = vmatpush1.msra.mxu0 %v418
          %557 = vmatprep.subr.mxu0 %v421
          %558 = vmatpush1.msra.mxu0 %v420
          %559 = vmatprep.subr.mxu0 %v423
          %560 = vmatpush1.msra.mxu0 %v422
          %561 = vmatprep.subr.mxu0 %v425
          %562 = vmatpush1.msra.mxu0 %v424
          %563 = vmatprep.subr.mxu0 %v427
          %564 = vmatpush1.msra.mxu0 %v426
          %565 = vmatprep.subr.mxu0 %v429
          %566 = vmatpush1.msra.mxu0 %v428
          %567 = vmatprep.subr.mxu0 %v431
          %568 = vmatpush1.msra.mxu0 %v430
          %569 = vmatprep.subr.mxu0 %v433
          %570 = vmatpush1.msra.mxu0 %v432
          %571 = vmatprep.subr.mxu0 %v435
          %572 = vmatpush1.msra.mxu0 %v434
          %573 = vmatprep.subr.mxu0 %v437
          %574 = vmatpush1.msra.mxu0 %v436
          %575 = vmatprep.subr.mxu0 %v439
          %576 = vmatpush1.msra.mxu0 %v438
          %577 = vmatprep.subr.mxu0 %v441
          %578 = vmatpush1.msra.mxu0 %v440
          %579 = vmatprep.subr.mxu0 %v443
          %580 = vmatpush1.msra.mxu0 %v442
          %581 = vmatprep.subr.mxu0 %v445
          %582 = vmatpush1.msra.mxu0 %v444
          %583 = vmatprep.subr.mxu0 %v447
          %584 = vmatpush1.msra.mxu0 %v446
          %585 = vmatprep.subr.mxu0 %v449
          %586 = vmatpush1.msra.mxu0 %v448
          %587 = vmatprep.subr.mxu0 %v451
          %588 = vmatpush1.msra.mxu0 %v450
          %589 = vmatprep.subr.mxu0 %v453
          %590 = vmatpush1.msra.mxu0 %v452
          %591 = vmatprep.subr.mxu0 %v455
          %592 = vmatpush1.msra.mxu0 %v454
          %593 = vmatprep.subr.mxu0 %v457
          %594 = vmatpush1.msra.mxu0 %v456
          %595 = vmatprep.subr.mxu0 %v459
          %596 = vmatpush1.msra.mxu0 %v458
          %597 = vmatprep.subr.mxu0 %v461
          %598 = vmatpush1.msra.mxu0 %v460
          %599 = vmatprep.subr.mxu0 %v463
          %600 = vmatpush1.msra.mxu0 %v462
          %601 = vmatprep.mubr.f32.mxu0 %v333
          %602 = vmatmul.mubr.f32.gmra.mrb[0].mxu0 %v329
          %v603 = vpop.f32.mrb[0].mxu0
          %v604 = vadd.f32 %v533, %v603
          %v605 = vpop.f32.mrb[0].mxu0
          %v606 = vadd.f32 %v535, %v605
          %607 = vdwg.mxu0
          %v608 = vxor.u32 %v604, 2147483648
          %v609 = vxor.u32 %v606, 2147483648
          %v610 = vmul.f32 %v608, 1.442695
          %v611 = vpow.pop %v610
          %v612 = vmul.f32 %v609, 1.442695
          %v613 = vpow.pop %v612
          %v614 = vadd.f32 %v611, 1.0
          %v615 = vadd.f32 %v613, 1.0
          %v616 = vrcp.pop %v614
          %v617 = vmul.f32 1.0, %v616
          %v618 = vrcp.pop %v615
          %v619 = vmul.f32 1.0, %v618
          %v622 = vcombine.low %v617, %v619
          %v624 = vunpack.c.l.s4 1966171168
          %v625 = vunpack.c.0.s8 %v624
          %v626 = vlaneseq
          %v627 = vshrl.u32 %v626, 7
          %v628 = vsub.s32 %v625, %v627
          %v629 = vrot.slane %v622, %v628
          %v631 = vunpack.c.l.s4 1966171168
          %v632 = vunpack.c.0.s8 %v631
          %v633 = vlaneseq
          %v634 = vshrl.u32 %v633, 7
          %v635 = vsub.s32 %v632, %v634
          %v636 = vrot.slane %v629, %v635
          %638 = vst.msk [vmem:[%s218] sm:$0x3] %vm271, %v636
        $region48: #{tpu_custom_call.1} parent=31 // pred_fallthru
          _
        %s639 = sand.u32 %s112, 1
        %s640 = scalar_lea.sflag [#allocation7], %s639
        %s641 = sand.u32 %s112, 1
        %s642 = smul.addr %s641, 2
        %s643 = scalar_lea.vmem [#allocation10], %s642
        // Predicated region
        $region49: #{tpu_custom_call.1} parent=31 // pred_check
          %p644 = pneg %p122
        $region50: #{tpu_custom_call.1} parent=31 // pred_check_branch
          %646 = sbr.rel (%p644) target = $region52
        $region51: #{tpu_custom_call.1} parent=31 // pred_region
          %s648 = ssub.s32 32, 32
          %649 = vsyncadd %s640, %s648
          %s650 = smul.addr %s26, 2
          %s651 = smul.addr %s650, 16
          %s652 = scalar_lea.hbm %s3, %s651
          %s654 = sshll.u32 %s643, 4
          %s655 = int_to_ptr.vmem [resolvable:$true] %s654
          %657 = dma.vmem_to_hbm [thread:$0]  %s655, 32, %s652, %s640
        $region52: #{tpu_custom_call.1} parent=31 // pred_fallthru
          _
      $region32: #{tpu_custom_call.1} parent=5 // pred_fallthru
        _
      %p658 = scmp.le.s32.totalorder 2, %s17
      // Predicated region
      $region53: #{tpu_custom_call.1} parent=5 // pred_check
        %p659 = pneg %p658
      $region54: #{tpu_custom_call.1} parent=5 // pred_check_branch
        %661 = sbr.rel (%p659) target = $region56
      $region55: #{tpu_custom_call.1} parent=5 // pred_region
        %s662 = ssub.s32 %s17, 2
        // Predicated region
        $region57: #{tpu_custom_call.1} parent=55 // pred_check
          %p663 = pneg %p128
        $region58: #{tpu_custom_call.1} parent=55 // pred_check_branch
          %665 = sbr.rel (%p663) target = $region60
        $region59: #{tpu_custom_call.1} parent=55 // pred_region
          %s666 = sand.u32 %s113, 1
          %s667 = scalar_lea.sflag [#allocation7], %s666
          %s668 = sand.u32 %s113, 1
          %s669 = smul.addr %s668, 2
          %s670 = scalar_lea.vmem [#allocation10], %s669
          %671 = dma.done %s667, 32
        $region60: #{tpu_custom_call.1} parent=55 // pred_fallthru
          _
      $region56: #{tpu_custom_call.1} parent=5 // pred_fallthru
        _
    $region6: #{tpu_custom_call.1} parent=1 // loop_footer
      %s21 = sadd.s32 1, %s17
    $region7: #{tpu_custom_call.1} parent=1 // loop_footer_branch
      %16 = sbr.rel target = $region3
    $region8: #{tpu_custom_call.1} parent=1 // loop_exit
      _
    %672 = vsyncpa [#allocation6], 1
    %s673 = scalar_lea.sflag [#allocation6], 1
    %674 = vsyncpa %s673, 1
    %675 = vsyncpa [#allocation9], 1
    %676 = vsyncpa [#allocation7], 1
    %s677 = scalar_lea.sflag [#allocation7], 1
    %678 = vsyncpa %s677, 1

</llo_original>
